<compile_context>
chip_gen: v7x
topology: tpu7x:2x2x1
jax: 0.10.0
libtpu: 0.0.40
codegen_flags: <defaults>
</compile_context>

<pallas_src>
import functools

import jax
import jax.numpy as jnp
from jax.experimental import pallas as pl
from jax.experimental.pallas import tpu as pltpu

LN_EPS = 1e-5  # torch.nn.functional.layer_norm default


def _round_up(a, b):
    return (a + b - 1) // b * b


def _cdiv(a, b):
    return (a + b - 1) // b


_VMEM_BUDGET = None


def _vmem_budget_bytes():
    """Per-TensorCore VMEM budget (bytes) the kernel plans against."""
    global _VMEM_BUDGET
    if _VMEM_BUDGET is None:
        try:
            cap = int(pltpu.get_tpu_info().vmem_capacity_bytes)
        except Exception:          # conservative fallback = v7x per-TC VMEM
            cap = 64 << 20
        _VMEM_BUDGET = max(int(cap * 0.85), 32 << 20)
    return _VMEM_BUDGET


def _pick_tm(M, tm_cap):
    """Row tile: multiple of 8, fits cap, >=2 grid steps when M >= 256,
    and balanced so the ragged last block wastes <= 7 rows of compute."""
    tm_cap = max((int(tm_cap) // 8) * 8, 8)
    tm_eff = min(tm_cap, _round_up(M, 8))
    grid_m = _cdiv(M, tm_eff)
    if grid_m == 1 and M >= 256:
        grid_m = 2                      # let both v7x TensorCores work
    return _round_up(_cdiv(M, grid_m), 8)


# ----------------------------- kernels -------------------------------------


def _layer_norm_store(y, mask, o_ref, inv_p):
    # Padded columns of `y` are exactly 0 (weight AND bias were zero padded by
    # prepare_params), so the row-sum already equals the sum over the true
    # columns; divide by the TRUE width and mask before the variance pass.
    mean = jnp.sum(y, axis=-1, keepdims=True) * inv_p
    centered = (y - mean) * mask
    var = jnp.sum(centered * centered, axis=-1, keepdims=True) * inv_p
    o_ref[...] = (centered * jax.lax.rsqrt(var + LN_EPS)).astype(o_ref.dtype)


def _je_kernel_resident(x_ref, w_ref, b_ref, m_ref, o_ref, *, inv_p):
    # x_ref: (tm, K) activation dtype; w_ref: (K, P_pad) resident, mm dtype;
    # b_ref/m_ref: (1, P_pad) f32 resident; o_ref: (tm, P_pad).
    y = jnp.dot(x_ref[...].astype(w_ref.dtype), w_ref[...],
                preferred_element_type=jnp.float32)
    _layer_norm_store(y + b_ref[...], m_ref[...], o_ref, inv_p)


def _je_kernel_ktiled(x_ref, w_ref, b_ref, m_ref, o_ref, acc_ref, *, inv_p):
    # Fallback when (K, P_pad) weight does not fit VMEM: stream weight slabs
    # over an "arbitrary" K grid axis, accumulate in f32 VMEM scratch.
    k = pl.program_id(1)

    @pl.when(k == 0)
    def _():
        acc_ref[...] = jnp.zeros_like(acc_ref)

    acc_ref[...] += jnp.dot(x_ref[...].astype(w_ref.dtype), w_ref[...],
                            preferred_element_type=jnp.float32)

    @pl.when(k == pl.num_programs(1) - 1)
    def _():
        _layer_norm_store(acc_ref[...] + b_ref[...], m_ref[...], o_ref, inv_p)


# ----------------------------- wrapper --------------------------------------


def prepare_params(weight, bias, *, mm_dtype=jnp.bfloat16):
    """One-time parameter prep (call OUTSIDE the hot loop).

    weight: (num_parents, input_dim)  -- PyTorch nn.Linear layout.
    bias  : (num_parents,)
    Returns (w_kp, b_row, mask_row):
      w_kp     (input_dim, P_pad) mm_dtype, padded columns exactly 0
      b_row    (1, P_pad) f32, padded entries exactly 0
      mask_row (1, P_pad) f32, 1.0 on true columns, 0.0 on padding
    NOTE: the kernel's LayerNorm math relies on the exact-zero padding.
    """
    P, K = weight.shape
    p_pad = _round_up(max(P, 128), 128)
    w_kp = jnp.asarray(weight, dtype=mm_dtype).T          # (K, P)
    b_row = jnp.asarray(bias, dtype=jnp.float32).reshape(1, P)
    if p_pad != P:
        w_kp = jnp.pad(w_kp, ((0, 0), (0, p_pad - P)))
        b_row = jnp.pad(b_row, ((0, 0), (0, p_pad - P)))
    mask_row = (jnp.arange(p_pad, dtype=jnp.int32) < P).astype(jnp.float32)
    return w_kp, b_row, mask_row.reshape(1, p_pad)


@functools.partial(jax.jit, static_argnames=("num_parents", "tm", "out_dtype"))
def je_parent_classifier_prepped(x, w_kp, b_row, mask_row, *, num_parents,
                                 tm=512, out_dtype=None):
    """Fused fc + layer_norm on pre-prepared params (see prepare_params).

    x: (..., input_dim) -> (..., num_parents) in `out_dtype` (default x.dtype;
    pass jnp.bfloat16 to halve writeback when downstream tolerates it).
    """
    orig_shape = x.shape
    K = orig_shape[-1]
    k_w, p_pad = w_kp.shape
    assert k_w == K, "weight / activation feature dims disagree"
    out_dtype = x.dtype if out_dtype is None else out_dtype

    x2d = x.reshape(-1, K)
    M = x2d.shape[0]

    x_item = jnp.dtype(x2d.dtype).itemsize
    w_item = jnp.dtype(w_kp.dtype).itemsize
    o_item = jnp.dtype(out_dtype).itemsize
    budget = _vmem_budget_bytes()

    # Resident-weight sizing: per-row cost includes double-buffered x and out
    # tiles plus ~3 compiler-materialized f32 LN temporaries.
    per_row_res = 2 * K * x_item + 2 * p_pad * o_item + 3 * p_pad * 4
    fixed_res = K * p_pad * w_item + 2 * p_pad * 4 + (2 << 20)
    tm_min = min(_round_up(M, 8), 128)
    resident_ok = fixed_res + tm_min * per_row_res <= budget

    inv_p = 1.0 / num_parents

    if resident_ok:
        tm_max = max((budget - fixed_res) // per_row_res, 8)
        tm_eff = _pick_tm(M, min(tm, tm_max))
        grid = (_cdiv(M, tm_eff),)
        vmem_need = fixed_res + tm_eff * per_row_res
        kernel = functools.partial(_je_kernel_resident, inv_p=inv_p)
        in_specs = [
            pl.BlockSpec((tm_eff, K), lambda i: (i, 0)),
            pl.BlockSpec((K, p_pad), lambda i: (0, 0),
                         pipeline_mode=pl.Buffered(1)),      # resident weight
            pl.BlockSpec((1, p_pad), lambda i: (0, 0),
                         pipeline_mode=pl.Buffered(1)),      # resident bias
            pl.BlockSpec((1, p_pad), lambda i: (0, 0),
                         pipeline_mode=pl.Buffered(1)),      # resident mask
        ]
        out_spec = pl.BlockSpec((tm_eff, p_pad), lambda i: (i, 0))
        scratch = []
        semantics = ("parallel",)
    else:
        # K-tiled fallback: weight streamed in (tk, P_pad) slabs.
        # TODO(synk): very large P_pad still needs a P-tiled two-pass LayerNorm;
        # this path only tiles the reduction (K) axis.
        tk = next((t for t in (512, 256, 128) if K % t == 0), None)
        if tk is None:
            tk = 128
            k_pad = _round_up(K, tk)
            x2d = jnp.pad(x2d, ((0, 0), (0, k_pad - K)))
            w_kp = jnp.pad(w_kp, ((0, k_pad - K), (0, 0)))
            K = k_pad
        per_row_kt = 2 * tk * x_item + 2 * p_pad * o_item + 4 * p_pad * 4
        fixed_kt = 2 * tk * p_pad * w_item + 2 * p_pad * 4 + (2 << 20)
        tm_max = max((budget - fixed_kt) // per_row_kt, 8)
        tm_eff = _pick_tm(M, min(tm, tm_max))
        grid = (_cdiv(M, tm_eff), K // tk)
        vmem_need = fixed_kt + tm_eff * per_row_kt
        kernel = functools.partial(_je_kernel_ktiled, inv_p=inv_p)
        in_specs = [
            pl.BlockSpec((tm_eff, tk), lambda i, k: (i, k)),
            pl.BlockSpec((tk, p_pad), lambda i, k: (k, 0)),
            pl.BlockSpec((1, p_pad), lambda i, k: (0, 0),
                         pipeline_mode=pl.Buffered(1)),
            pl.BlockSpec((1, p_pad), lambda i, k: (0, 0),
                         pipeline_mode=pl.Buffered(1)),
        ]
        out_spec = pl.BlockSpec((tm_eff, p_pad), lambda i, k: (i, 0))
        scratch = [pltpu.VMEM((tm_eff, p_pad), jnp.float32)]
        semantics = ("parallel", "arbitrary")

    vmem_limit = int(min(max(vmem_need + (4 << 20), 32 << 20),
                         max(budget, vmem_need)))

    cost = pl.CostEstimate(
        flops=2 * M * K * p_pad,
        transcendentals=M,  # one rsqrt per row
        bytes_accessed=(M * K * x_item + K * p_pad * w_item
                        + 2 * p_pad * 4 + M * p_pad * o_item),
    )

    out2d = pl.pallas_call(
        kernel,
        out_shape=jax.ShapeDtypeStruct((M, p_pad), out_dtype),
        grid_spec=pltpu.PrefetchScalarGridSpec(
            num_scalar_prefetch=0,
            grid=grid,
            in_specs=in_specs,
            out_specs=out_spec,
            scratch_shapes=scratch,
        ),
        compiler_params=pltpu.CompilerParams(
            dimension_semantics=semantics,
            vmem_limit_bytes=vmem_limit,
        ),
        cost_estimate=cost,
    )(x2d, w_kp, b_row, mask_row)

    out2d = out2d[:, :num_parents]
    return out2d.reshape(*orig_shape[:-1], num_parents)


def je_parent_classifier(x, weight, bias, *, tm=512, mm_dtype=jnp.bfloat16,
                         out_dtype=None):
    """Convenience wrapper (preps params every call). For repeated calls use
    prepare_params() once + je_parent_classifier_prepped(). Pass
    mm_dtype=jnp.float32 for exact f32 nn.Linear parity."""
    w_kp, b_row, mask_row = prepare_params(weight, bias, mm_dtype=mm_dtype)
    return je_parent_classifier_prepped(
        x, w_kp, b_row, mask_row,
        num_parents=int(weight.shape[0]), tm=tm, out_dtype=out_dtype)


def init_params(key, input_dim, num_parents, std=2e-5):
    # trunc_normal_(fc.weight, std=2e-5): truncated normal in [-2*std, 2*std]
    w = std * jax.random.truncated_normal(
        key, -2.0, 2.0, (num_parents, input_dim), dtype=jnp.float32)
    b = jnp.zeros((num_parents,), dtype=jnp.float32)  # constant_(bias, 0)
    return w, b


if __name__ == "__main__":
    key = jax.random.PRNGKey(0)
    k_x, k_w = jax.random.split(key)

    batch, seq, input_dim, num_parents = 2, 8, 32, 16
    x = jax.random.normal(k_x, (batch, seq, input_dim), dtype=jnp.float32)
    w, b = init_params(k_w, input_dim, num_parents)

    # Pure-JAX reference with PyTorch semantics (f32 Linear + LayerNorm).
    y_ref = jnp.einsum("bsk,pk->bsp", x, w) + b
    mean = y_ref.mean(axis=-1, keepdims=True)
    var = ((y_ref - mean) ** 2).mean(axis=-1, keepdims=True)
    ref = (y_ref - mean) / jnp.sqrt(var + LN_EPS)

    # f32-matmul path (exact parity with the PyTorch module).
    w32, b32, m32 = prepare_params(w, b, mm_dtype=jnp.float32)
    out_f32 = jax.block_until_ready(
        je_parent_classifier_prepped(x, w32, b32, m32, num_parents=num_parents))

    # Default bf16-matmul path (f32 MXU accumulation) via convenience wrapper.
    out_bf = jax.block_until_ready(je_parent_classifier(x, w, b))

    assert out_f32.shape == (batch, seq, num_parents)
    assert out_bf.shape == (batch, seq, num_parents)
    assert bool(jnp.isfinite(out_f32).all()) and bool(jnp.isfinite(out_bf).all())
    assert jnp.allclose(out_f32, ref, atol=1e-2, rtol=1e-2), \
        float(jnp.max(jnp.abs(out_f32 - ref)))
    assert jnp.allclose(out_bf, ref, atol=6e-2, rtol=6e-2), \
        float(jnp.max(jnp.abs(out_bf - ref)))

    print("KERNEL_OK")
</pallas_src>

<mosaic_0001>
module attributes {stable_mosaic.version = 11 : i64} {
  func.func @_je_kernel_resident(%arg0: i32, %arg1: memref<16x32xf32, #tpu.memory_space<vmem>>, %arg2: memref<32x128xf32, #tpu.memory_space<vmem>>, %arg3: memref<1x128xf32, #tpu.memory_space<vmem>>, %arg4: memref<1x128xf32, #tpu.memory_space<vmem>>, %arg5: memref<16x128xf32, #tpu.memory_space<vmem>>) attributes {dimension_semantics = [#tpu.dimension_semantics<parallel>], iteration_bounds = array<i64: 1>, scalar_prefetch = 0 : i64, scratch_operands = 0 : i64, tpu.core_type = #tpu.core_type<tc>, window_params = [{transform_indices = @transform_0, window_bounds = array<i64: 16, 32>}, {pipeline_mode = #tpu.pipeline_mode<synchronous>, transform_indices = @transform_1, window_bounds = array<i64: 32, 128>}, {pipeline_mode = #tpu.pipeline_mode<synchronous>, transform_indices = @transform_2, window_bounds = array<i64: 1, 128>}, {pipeline_mode = #tpu.pipeline_mode<synchronous>, transform_indices = @transform_3, window_bounds = array<i64: 1, 128>}, {transform_indices = @transform_4, window_bounds = array<i64: 16, 128>}]} {
    %c0 = arith.constant 0 : index
    %c0_0 = arith.constant 0 : index
    %0 = vector.load %arg1[%c0, %c0_0] : memref<16x32xf32, #tpu.memory_space<vmem>>, vector<16x32xf32>
    %c0_1 = arith.constant 0 : index
    %c0_2 = arith.constant 0 : index
    %1 = vector.load %arg2[%c0_1, %c0_2] : memref<32x128xf32, #tpu.memory_space<vmem>>, vector<32x128xf32>
    %cst = arith.constant dense<0.000000e+00> : vector<16x128xf32>
    %2 = tpu.matmul %0, %1, %cst {dimension_numbers = #tpu.dot_dimension_numbers<[1], [0], [0], [1], [0, 0, 1, 1], [], []>} : vector<16x32xf32>, vector<32x128xf32>, vector<16x128xf32> -> vector<16x128xf32>
    %c0_3 = arith.constant 0 : index
    %c0_4 = arith.constant 0 : index
    %3 = vector.load %arg3[%c0_3, %c0_4] : memref<1x128xf32, #tpu.memory_space<vmem>>, vector<1x128xf32>
    %4 = vector.broadcast %3 : vector<1x128xf32> to vector<16x128xf32>
    %5 = arith.addf %2, %4 : vector<16x128xf32>
    %c0_5 = arith.constant 0 : index
    %c0_6 = arith.constant 0 : index
    %6 = vector.load %arg4[%c0_5, %c0_6] : memref<1x128xf32, #tpu.memory_space<vmem>>, vector<1x128xf32>
    %cst_7 = arith.constant dense<0.000000e+00> : vector<16xf32>
    %7 = vector.multi_reduction <add>, %5, %cst_7 [1] : vector<16x128xf32> to vector<16xf32>
    %8 = vector.shape_cast %7 : vector<16xf32> to vector<16x1xf32>
    %cst_8 = arith.constant 6.250000e-02 : f32
    %9 = vector.broadcast %cst_8 : f32 to vector<16x1xf32>
    %10 = arith.mulf %8, %9 : vector<16x1xf32>
    %11 = vector.broadcast %10 : vector<16x1xf32> to vector<16x128xf32>
    %12 = arith.subf %5, %11 : vector<16x128xf32>
    %13 = vector.broadcast %6 : vector<1x128xf32> to vector<16x128xf32>
    %14 = arith.mulf %12, %13 : vector<16x128xf32>
    %15 = arith.mulf %14, %14 : vector<16x128xf32>
    %cst_9 = arith.constant dense<0.000000e+00> : vector<16xf32>
    %16 = vector.multi_reduction <add>, %15, %cst_9 [1] : vector<16x128xf32> to vector<16xf32>
    %17 = vector.shape_cast %16 : vector<16xf32> to vector<16x1xf32>
    %cst_10 = arith.constant 6.250000e-02 : f32
    %18 = vector.broadcast %cst_10 : f32 to vector<16x1xf32>
    %19 = arith.mulf %17, %18 : vector<16x1xf32>
    %cst_11 = arith.constant 9.99999974E-6 : f32
    %20 = vector.broadcast %cst_11 : f32 to vector<16x1xf32>
    %21 = arith.addf %19, %20 : vector<16x1xf32>
    %22 = math.rsqrt %21 : vector<16x1xf32>
    %23 = vector.broadcast %22 : vector<16x1xf32> to vector<16x128xf32>
    %24 = arith.mulf %14, %23 : vector<16x128xf32>
    %c0_12 = arith.constant 0 : index
    %c0_13 = arith.constant 0 : index
    %25 = vector.load %arg5[%c0_12, %c0_13] : memref<16x128xf32, #tpu.memory_space<vmem>>, vector<16x128xf32>
    tpu.vector_store %arg5[%c0_12, %c0_13], %24 {strides = array<i32>} : memref<16x128xf32, #tpu.memory_space<vmem>>, vector<16x128xf32>,
    return
  }
  func.func @transform_0(%arg0: i32) -> (i32, i32) {
    %c0_i32 = arith.constant 0 : i32
    %c0_i32_0 = arith.constant 0 : i32
    return %arg0, %c0_i32 : i32, i32
  }
  func.func @transform_1(%arg0: i32) -> (i32, i32) {
    %c0_i32 = arith.constant 0 : i32
    %c0_i32_0 = arith.constant 0 : i32
    %c0_i32_1 = arith.constant 0 : i32
    return %c0_i32, %c0_i32_0 : i32, i32
  }
  func.func @transform_2(%arg0: i32) -> (i32, i32) {
    %c0_i32 = arith.constant 0 : i32
    %c0_i32_0 = arith.constant 0 : i32
    %c0_i32_1 = arith.constant 0 : i32
    return %c0_i32, %c0_i32_0 : i32, i32
  }
  func.func @transform_3(%arg0: i32) -> (i32, i32) {
    %c0_i32 = arith.constant 0 : i32
    %c0_i32_0 = arith.constant 0 : i32
    %c0_i32_1 = arith.constant 0 : i32
    return %c0_i32, %c0_i32_0 : i32, i32
  }
  func.func @transform_4(%arg0: i32) -> (i32, i32) {
    %c0_i32 = arith.constant 0 : i32
    %c0_i32_0 = arith.constant 0 : i32
    return %arg0, %c0_i32 : i32, i32
  }
}

</mosaic_0001>

<llo_original>
// kernel: je_parent_classifier_prepped.1
$region0: #{je_parent_classifier_prepped.1}
  #allocation0 [shape = 'u32[]', space=smem, size = 0x4, offset = 0x4, fixed_abs, tag = 'smem constant byte address 0x4 - core index']
  #allocation1 [shape = 'u32[144,128]{1,0:T(1,128)}', space=vmem, size = 0x12000, scoped, tag = 'internal scratch']
  %s0 = inlined_call_operand.hbm [shape: f32[16,32], index: 0, kind: input, shape index: {}]
  %s1 = inlined_call_operand.hbm [shape: f32[32,128], index: 1, kind: input, shape index: {}]
  %s2 = inlined_call_operand.vmem [shape: f32[1,128], index: 2, kind: input, shape index: {}]
  %s3 = inlined_call_operand.vmem [shape: f32[1,128], index: 3, kind: input, shape index: {}]
  %s4 = inlined_call_operand.vmem [shape: f32[16,128], index: 4, kind: output, shape index: {}]
  %s5 = sld [smem:[#allocation0]]
  $region34: #{je_parent_classifier_prepped.1} parent=0
    _
  %s7 = ssub.s32 1, %s5
  %s8 = scalar_select 0, %s7, %s5
  $region1: #{je_parent_classifier_prepped.1} parent=0
    #allocation2 [shape = 'u8[8192]{0}', space=vmem, size = 0x2000, scoped, tag = 'input window, operand 0, single buffered']
    #allocation3 [shape = 's32[1]{0}', space=sflag, size = 0x4, scoped, tag = 'scoped memory for je_parent_classifier_prepped.1']
    #allocation4 [shape = 'u8[16384]{0}', space=vmem, size = 0x4000, scoped, tag = 'input window, operand 1, single buffered']
    #allocation5 [shape = 's32[1]{0}', space=sflag, size = 0x4, scoped, tag = 'scoped memory for je_parent_classifier_prepped.1']
    %9 = vsyncpa [#allocation3], 0
    %10 = vsyncpa [#allocation5], 0
    // Predicated region
    $region2: #{je_parent_classifier_prepped.1} parent=1 // pred_check
      _
    $region3: #{je_parent_classifier_prepped.1} parent=1 // pred_check_branch
      %12 = sbr.rel (0) target = $region5
    $region4: #{je_parent_classifier_prepped.1} parent=1 // pred_region
      %s14 = ssub.s32 256, 256
      %15 = vsyncadd [#allocation3], %s14
      %s16 = sshll.u32 [#allocation2], 4
      %s17 = int_to_ptr.vmem [resolvable:$true] %s16
      %22 = dma.hbm_to_vmem [thread:$0]  %s0, 256, %s17, [#allocation3], 128, 128, 8
    $region5: #{je_parent_classifier_prepped.1} parent=1 // pred_fallthru
      _
    // Predicated region
    $region6: #{je_parent_classifier_prepped.1} parent=1 // pred_check
      _
    $region7: #{je_parent_classifier_prepped.1} parent=1 // pred_check_branch
      %24 = sbr.rel (0) target = $region9
    $region8: #{je_parent_classifier_prepped.1} parent=1 // pred_region
      %s26 = ssub.s32 512, 512
      %27 = vsyncadd [#allocation5], %s26
      %s28 = sshll.u32 [#allocation4], 4
      %s29 = int_to_ptr.vmem [resolvable:$true] %s28
      %34 = dma.hbm_to_vmem [thread:$0]  %s1, 512, %s29, [#allocation5], 128, 128, 8
    $region9: #{je_parent_classifier_prepped.1} parent=1 // pred_fallthru
      _
    // Predicated region
    $region10: #{je_parent_classifier_prepped.1} parent=1 // pred_check
      _
    $region11: #{je_parent_classifier_prepped.1} parent=1 // pred_check_branch
      %36 = sbr.rel (0) target = $region13
    $region12: #{je_parent_classifier_prepped.1} parent=1 // pred_region
      _
    $region13: #{je_parent_classifier_prepped.1} parent=1 // pred_fallthru
      _
    // Predicated region
    $region14: #{je_parent_classifier_prepped.1} parent=1 // pred_check
      _
    $region15: #{je_parent_classifier_prepped.1} parent=1 // pred_check_branch
      %38 = sbr.rel (0) target = $region17
    $region16: #{je_parent_classifier_prepped.1} parent=1 // pred_region
      _
    $region17: #{je_parent_classifier_prepped.1} parent=1 // pred_fallthru
      _
    // Predicated region
    $region18: #{je_parent_classifier_prepped.1} parent=1 // pred_check
      _
    $region19: #{je_parent_classifier_prepped.1} parent=1 // pred_check_branch
      %40 = sbr.rel (0) target = $region21
    $region20: #{je_parent_classifier_prepped.1} parent=1 // pred_region
      %41 = dma.done [#allocation3], 256
    $region21: #{je_parent_classifier_prepped.1} parent=1 // pred_fallthru
      _
    // Predicated region
    $region22: #{je_parent_classifier_prepped.1} parent=1 // pred_check
      _
    $region23: #{je_parent_classifier_prepped.1} parent=1 // pred_check_branch
      %43 = sbr.rel (0) target = $region25
    $region24: #{je_parent_classifier_prepped.1} parent=1 // pred_region
      %44 = dma.done [#allocation5], 512
    $region25: #{je_parent_classifier_prepped.1} parent=1 // pred_fallthru
      _
    %v45 = vld [vmem:[#allocation2] sm:$0xff]
    %v46 = vld [vmem:[#allocation2 + $0x8] sm:$0xff]
    %v47 = vld [vmem:[#allocation4] sm:$0xff]
    %v48 = vld [vmem:[#allocation4 + $0x8] sm:$0xff]
    %v49 = vld [vmem:[#allocation4 + $0x10] sm:$0xff]
    %v50 = vld [vmem:[#allocation4 + $0x18] sm:$0xff]
    %v51 = vld [vmem:[%s2] sm:$0x1]
    %v53 = vlaneseq
    %v54 = vshrl.u32 %v53, 7
    %v55 = vsub.s32 0, %v54
    %v56 = vrot.slane %v51, %v55
    %vm58 = vcmask 261120
    %v60 = vsel %vm58, %v45, 0
    %v63 = vsel %vm58, %v46, 0
    %65 = vmatprep.subr.mxu0 0.0
    %66 = vmatpush1.msra.mxu0 %v47
    %67 = vmatprep.subr.mxu0 0.0
    %68 = vmatpush1.msra.mxu0 %v48
    %69 = vmatprep.subr.mxu0 0.0
    %70 = vmatpush1.msra.mxu0 %v49
    %71 = vmatprep.subr.mxu0 0.0
    %72 = vmatpush1.msra.mxu0 %v50
    %73 = vmatprep.subr.mxu0 0.0
    %74 = vmatpush1.msra.mxu0 0.0
    %75 = vmatprep.subr.mxu0 0.0
    %76 = vmatpush1.msra.mxu0 0.0
    %77 = vmatprep.subr.mxu0 0.0
    %78 = vmatpush1.msra.mxu0 0.0
    %79 = vmatprep.subr.mxu0 0.0
    %80 = vmatpush1.msra.mxu0 0.0
    %81 = vmatprep.subr.mxu0 0.0
    %82 = vmatpush1.msra.mxu0 0.0
    %83 = vmatprep.subr.mxu0 0.0
    %84 = vmatpush1.msra.mxu0 0.0
    %85 = vmatprep.subr.mxu0 0.0
    %86 = vmatpush1.msra.mxu0 0.0
    %87 = vmatprep.subr.mxu0 0.0
    %88 = vmatpush1.msra.mxu0 0.0
    %89 = vmatprep.subr.mxu0 0.0
    %90 = vmatpush1.msra.mxu0 0.0
    %91 = vmatprep.subr.mxu0 0.0
    %92 = vmatpush1.msra.mxu0 0.0
    %93 = vmatprep.subr.mxu0 0.0
    %94 = vmatpush1.msra.mxu0 0.0
    %95 = vmatprep.subr.mxu0 0.0
    %96 = vmatpush1.msra.mxu0 0.0
    %97 = vmatprep.subr.mxu0 0.0
    %98 = vmatpush1.msra.mxu0 0.0
    %99 = vmatprep.subr.mxu0 0.0
    %100 = vmatpush1.msra.mxu0 0.0
    %101 = vmatprep.subr.mxu0 0.0
    %102 = vmatpush1.msra.mxu0 0.0
    %103 = vmatprep.subr.mxu0 0.0
    %104 = vmatpush1.msra.mxu0 0.0
    %105 = vmatprep.subr.mxu0 0.0
    %106 = vmatpush1.msra.mxu0 0.0
    %107 = vmatprep.subr.mxu0 0.0
    %108 = vmatpush1.msra.mxu0 0.0
    %109 = vmatprep.subr.mxu0 0.0
    %110 = vmatpush1.msra.mxu0 0.0
    %111 = vmatprep.subr.mxu0 0.0
    %112 = vmatpush1.msra.mxu0 0.0
    %113 = vmatprep.subr.mxu0 0.0
    %114 = vmatpush1.msra.mxu0 0.0
    %115 = vmatprep.subr.mxu0 0.0
    %116 = vmatpush1.msra.mxu0 0.0
    %117 = vmatprep.subr.mxu0 0.0
    %118 = vmatpush1.msra.mxu0 0.0
    %119 = vmatprep.subr.mxu0 0.0
    %120 = vmatpush1.msra.mxu0 0.0
    %121 = vmatprep.subr.mxu0 0.0
    %122 = vmatpush1.msra.mxu0 0.0
    %123 = vmatprep.subr.mxu0 0.0
    %124 = vmatpush1.msra.mxu0 0.0
    %125 = vmatprep.subr.mxu0 0.0
    %126 = vmatpush1.msra.mxu0 0.0
    %127 = vmatprep.subr.mxu0 0.0
    %128 = vmatpush1.msra.mxu0 0.0
    %129 = vmatprep.mubr.f32.mxu0 0.0
    %130 = vmatmul.mubr.f32.gmra.mrb[0].mxu0 %v60
    %v131 = vpop.f32.mrb[0].mxu0
    %v132 = vadd.f32 %v56, %v131
    %v133 = vpop.f32.mrb[0].mxu0
    %134 = vmatprep.mubr.f32.mxu0 0.0
    %135 = vmatmul.mubr.f32.gmra.mrb[0].mxu0 %v63
    %v136 = vpop.f32.mrb[0].mxu0
    %v137 = vadd.f32 %v56, %v136
    %v138 = vpop.f32.mrb[0].mxu0
    %139 = vdwg.mxu0
    %v140 = vld [vmem:[%s3] sm:$0x1]
    %141 = vadd.xlane.f32.xlu0 %v132
    %v142 = vpop.xlane.xlu0 %141
    %143 = vadd.xlane.f32.xlu0 %v137
    %v144 = vpop.xlane.xlu0 %143
    %v145 = vmul.f32 %v142, 0.0625
    %v146 = vmul.f32 %v144, 0.0625
    %v147 = vsub.f32 %v132, %v145
    %v148 = vsub.f32 %v137, %v146
    %v150 = vlaneseq
    %v151 = vshrl.u32 %v150, 7
    %v152 = vsub.s32 0, %v151
    %v153 = vrot.slane %v140, %v152
    %v155 = vmul.f32 %v147, %v153
    %v156 = vmul.f32 %v148, %v153
    %v157 = vmul.f32 %v155, %v155
    %v158 = vmul.f32 %v156, %v156
    %159 = vadd.xlane.f32.xlu0 %v157
    %v160 = vpop.xlane.xlu0 %159
    %161 = vadd.xlane.f32.xlu0 %v158
    %v162 = vpop.xlane.xlu0 %161
    %v163 = vmul.f32 %v160, 0.0625
    %v164 = vmul.f32 %v162, 0.0625
    %v165 = vadd.f32 %v163, 1e-05
    %v166 = vadd.f32 %v164, 1e-05
    %v167 = vrsqrt.pop %v165
    %v168 = vrsqrt.pop %v166
    %v169 = vmul.f32 %v155, %v167
    %v170 = vmul.f32 %v156, %v168
    %171 = vst [vmem:[%s4] sm:$0xff] %v169
    %172 = vst [vmem:[%s4 + $0x8] sm:$0xff] %v170
    // Predicated region
    $region26: #{je_parent_classifier_prepped.1} parent=1 // pred_check
      _
    $region27: #{je_parent_classifier_prepped.1} parent=1 // pred_check_branch
      %174 = sbr.rel (0) target = $region29
    $region28: #{je_parent_classifier_prepped.1} parent=1 // pred_region
      _
    $region29: #{je_parent_classifier_prepped.1} parent=1 // pred_fallthru
      _
    // Predicated region
    $region30: #{je_parent_classifier_prepped.1} parent=1 // pred_check
      _
    $region31: #{je_parent_classifier_prepped.1} parent=1 // pred_check_branch
      %176 = sbr.rel (0) target = $region33
    $region32: #{je_parent_classifier_prepped.1} parent=1 // pred_region
      _
    $region33: #{je_parent_classifier_prepped.1} parent=1 // pred_fallthru
      _
    %177 = vsyncpa [#allocation3], 1
    %178 = vsyncpa [#allocation5], 1

</llo_original>
